<compile_context>
chip_gen: v6e
topology: v6e:2x2x1
jax: 0.10.0
libtpu: 0.0.40
codegen_flags: <defaults>
</compile_context>

<pallas_src>
import functools

import jax
import jax.numpy as jnp
from jax.experimental import pallas as pl
from jax.experimental.pallas import tpu as pltpu


def _round_up(x, m):
    return ((x + m - 1) // m) * m


def _choose_group(batch, n, target_rows=256):
    """Graphs per grid step: fill ~target_rows MXU rows, keep >=2 grid steps."""
    g = max(1, min(target_rows // n, batch))
    if g >= 8:
        g = (g // 8) * 8                       # sublane-dense output blocks
    if pl.cdiv(batch, g) < 2 and batch > 1:    # keep >=2 steps (v7x megacore)
        half = pl.cdiv(batch, 2)
        g = _round_up(half, 8) if half >= 8 else batch
    return g


def _gcn_tile_kernel(a_ref, h_ref, w1_ref, b1_ref, w2_ref, b2_ref,
                     wc1_ref, bc1_ref, wc3_ref, bc3_ref, out_ref, *, G, n):
    """G graphs per grid step: 2x GraphConv + mean-pool + MLP head, fused."""
    a = a_ref[...]          # (G*n, G*n) bf16 block-diagonal normalized adjacency
    h = h_ref[...]          # (G*n, Dp)  bf16 node features (lane-padded)

    # GraphConv 1, reassociated as (A @ H) @ W1:
    ah = jnp.dot(a, h, preferred_element_type=jnp.float32)             # (G*n, Dp)
    h1 = jnp.dot(ah.astype(jnp.bfloat16), w1_ref[...],
                 preferred_element_type=jnp.float32) + b1_ref[...]
    h1 = jnp.maximum(h1, 0.0)                                           # (G*n, Hp)

    # GraphConv 2:  relu( A @ (H1 @ W2) + b2 )
    hw2 = jnp.dot(h1.astype(jnp.bfloat16), w2_ref[...],
                  preferred_element_type=jnp.float32)
    h2 = jnp.dot(a, hw2.astype(jnp.bfloat16),
                 preferred_element_type=jnp.float32) + b2_ref[...]
    h2 = jnp.maximum(h2, 0.0)                                           # (G*n, Hp)

    # dgl.mean_nodes: per-graph mean over nodes -> one XLU reduce per tile.
    hp = h2.shape[-1]
    hg = jnp.sum(h2.reshape(G, n, hp), axis=1) * (1.0 / n)              # (G, Hp)

    # classify1 + ReLU
    o1 = jnp.dot(hg.astype(jnp.bfloat16), wc1_ref[...],
                 preferred_element_type=jnp.float32) + bc1_ref[...]
    o1 = jnp.maximum(o1, 0.0)

    # classify3 (no activation); sublane/lane-dense (G, Cp) output store.
    out_ref[...] = (jnp.dot(o1.astype(jnp.bfloat16), wc3_ref[...],
                            preferred_element_type=jnp.float32) + bc3_ref[...])


@jax.jit
def gcn_reg_1mlp_forward(a_norm, h, params):
    """Fused GCN forward.

    a_norm : (B, n, n)       per-graph D^{-1/2} A D^{-1/2} blocks
    h      : (B, n, in_dim)  node features
    params : dict of weights/biases at their natural (unpadded) shapes
    returns: (B, n_classes)  f32
    """
    B, n, in_dim = h.shape
    hidden = params["w1"].shape[1]
    n_classes = params["wc3"].shape[1]
    assert n % 8 == 0, "node count per graph must be a multiple of 8 (sublane)"
    # TODO(synk): ragged graph batches (unequal node counts) need scalar-prefetch
    # per-graph node counts + masking of padded nodes in both A@X and the mean.

    Dp = max(128, _round_up(in_dim, 128))     # lane-dense input width
    Hp = max(128, _round_up(hidden, 128))     # lane-dense hidden width
    Cp = max(128, _round_up(n_classes, 128))  # lane-dense output width

    G = _choose_group(B, n)                   # graphs per grid step
    B_pad = _round_up(B, G)
    T = B_pad // G                            # grid length
    Gn = G * n

    # Pad the batch so it divides evenly into G-graph tiles (zero graphs).
    a_pad = jnp.pad(a_norm, ((0, B_pad - B), (0, 0), (0, 0)))
    h_pad = jnp.pad(h, ((0, B_pad - B), (0, 0), (0, in_dim and Dp - in_dim)))

    # Block-diagonal (Gn, Gn) adjacency per tile -> one dense MXU matmul.
    a_tiles = a_pad.reshape(T, G, n, n)
    eye_g = jnp.eye(G, dtype=a_pad.dtype)
    a_blk = (a_tiles[:, :, :, None, :] * eye_g[None, :, None, :, None])
    a_blk = a_blk.reshape(T * Gn, Gn).astype(jnp.bfloat16)              # (T*Gn, Gn)
    h_flat = h_pad.reshape(T * Gn, Dp).astype(jnp.bfloat16)             # (T*Gn, Dp)

    def pad2(x, r, c):
        return jnp.pad(x, ((0, r - x.shape[0]), (0, c - x.shape[1])))

    # bf16 for everything that feeds the MXU; biases / accumulation stay f32.
    w1 = pad2(params["w1"], Dp, Hp).astype(jnp.bfloat16)
    w2 = pad2(params["w2"], Hp, Hp).astype(jnp.bfloat16)
    wc1 = pad2(params["wc1"], Hp, Hp).astype(jnp.bfloat16)
    wc3 = pad2(params["wc3"], Hp, Cp).astype(jnp.bfloat16)
    b1 = pad2(params["b1"], 1, Hp).astype(jnp.float32)
    b2 = pad2(params["b2"], 1, Hp).astype(jnp.float32)
    bc1 = pad2(params["bc1"], 1, Hp).astype(jnp.float32)
    bc3 = pad2(params["bc3"], 1, Cp).astype(jnp.float32)

    const2d = lambda t: (0, 0)  # weights/biases: DMA once, stay VMEM-resident

    flops_tile = 2 * (Gn * Gn * Dp + Gn * Dp * Hp + Gn * Hp * Hp
                      + Gn * Gn * Hp + G * Hp * Hp + G * Hp * Cp)
    bytes_accessed = (2 * (a_blk.size + h_flat.size + w1.size + w2.size
                           + wc1.size + wc3.size)
                      + 4 * (b1.size + b2.size + bc1.size + bc3.size)
                      + 4 * B_pad * Cp)

    kernel = functools.partial(_gcn_tile_kernel, G=G, n=n)

    out = pl.pallas_call(
        kernel,
        out_shape=jax.ShapeDtypeStruct((B_pad, Cp), jnp.float32),
        grid_spec=pltpu.PrefetchScalarGridSpec(
            num_scalar_prefetch=0,
            grid=(T,),
            in_specs=[
                pl.BlockSpec((Gn, Gn), lambda t: (t, 0)),   # block-diag adjacency
                pl.BlockSpec((Gn, Dp), lambda t: (t, 0)),   # node features
                pl.BlockSpec((Dp, Hp), const2d),            # w1
                pl.BlockSpec((1, Hp), const2d),             # b1
                pl.BlockSpec((Hp, Hp), const2d),            # w2
                pl.BlockSpec((1, Hp), const2d),             # b2
                pl.BlockSpec((Hp, Hp), const2d),            # wc1
                pl.BlockSpec((1, Hp), const2d),             # bc1
                pl.BlockSpec((Hp, Cp), const2d),            # wc3
                pl.BlockSpec((1, Cp), const2d),             # bc3
            ],
            out_specs=pl.BlockSpec((G, Cp), lambda t: (t, 0)),
        ),
        compiler_params=pltpu.CompilerParams(
            dimension_semantics=("parallel",),     # shard tiles across TCs (v7x)
            vmem_limit_bytes=32 * 1024 * 1024,
        ),
        cost_estimate=pl.CostEstimate(
            flops=T * flops_tile, transcendentals=0, bytes_accessed=bytes_accessed),
    )(a_blk, h_flat, w1, b1, w2, b2, wc1, bc1, wc3, bc3)

    return out[:B, :n_classes]


def make_params(key, in_dim, hidden_dim, n_classes):
    """Deterministic synthetic parameters (shapes from GCNReg_1mlp.__init__)."""
    ks = jax.random.split(key, 8)
    scale = 0.1
    return {
        "w1": scale * jax.random.normal(ks[0], (in_dim, hidden_dim), jnp.float32),
        "b1": scale * jax.random.normal(ks[1], (1, hidden_dim), jnp.float32),
        "w2": scale * jax.random.normal(ks[2], (hidden_dim, hidden_dim), jnp.float32),
        "b2": scale * jax.random.normal(ks[3], (1, hidden_dim), jnp.float32),
        "wc1": scale * jax.random.normal(ks[4], (hidden_dim, hidden_dim), jnp.float32),
        "bc1": scale * jax.random.normal(ks[5], (1, hidden_dim), jnp.float32),
        "wc3": scale * jax.random.normal(ks[6], (hidden_dim, n_classes), jnp.float32),
        "bc3": scale * jax.random.normal(ks[7], (1, n_classes), jnp.float32),
    }


def make_batched_graph(key, nodes_per_graph, batch_size):
    """Random undirected graph batch, returned as per-graph normalized blocks.

    Returns a_norm of shape (B, n, n) with a_norm[b] = D^{-1/2} A_b D^{-1/2}
    (DGL GraphConv norm='both', no self-loops added).
    """
    n = nodes_per_graph
    keys = jax.random.split(key, batch_size)
    blocks = []
    for b in range(batch_size):
        upper = jax.random.bernoulli(keys[b], p=0.5, shape=(n, n)).astype(jnp.float32)
        upper = jnp.triu(upper, k=1)
        adj = upper + upper.T
        # guarantee no zero-degree nodes (DGL would raise otherwise): ring edges
        ring = jnp.eye(n, k=1) + jnp.eye(n, k=-1)
        ring = ring.at[0, n - 1].set(1.0).at[n - 1, 0].set(1.0)
        adj = jnp.clip(adj + ring, 0.0, 1.0)
        deg = jnp.sum(adj, axis=1)
        d_inv_sqrt = 1.0 / jnp.sqrt(jnp.maximum(deg, 1.0))
        blocks.append(adj * d_inv_sqrt[:, None] * d_inv_sqrt[None, :])
    return jnp.stack(blocks, axis=0)


def reference_forward(a_norm, h, params):
    """Pure-JAX f32 reference (batched block-diagonal == per-graph matmuls)."""
    h1 = jax.nn.relu(a_norm @ (h @ params["w1"]) + params["b1"])
    h2 = jax.nn.relu(a_norm @ (h1 @ params["w2"]) + params["b2"])
    hg = jnp.mean(h2, axis=1)                                  # (B, hidden)
    o1 = jax.nn.relu(hg @ params["wc1"] + params["bc1"])
    return o1 @ params["wc3"] + params["bc3"]                  # (B, n_classes)


if __name__ == "__main__":
    key = jax.random.PRNGKey(0)
    k_graph, k_feat, k_param = jax.random.split(key, 3)

    in_dim, hidden_dim, n_classes = 8, 32, 1
    batch_size, nodes_per_graph = 16, 8   # -> G=8 graphs/step, 2 grid steps

    a_norm = make_batched_graph(k_graph, nodes_per_graph, batch_size)
    h = jax.random.normal(k_feat, (batch_size, nodes_per_graph, in_dim), jnp.float32)
    params = make_params(k_param, in_dim, hidden_dim, n_classes)

    out = gcn_reg_1mlp_forward(a_norm, h, params)
    out = jax.block_until_ready(out)

    ref = reference_forward(a_norm, h, params)
    assert out.shape == (batch_size, n_classes)
    # bf16 MXU streams with f32 accumulation -> loosened tolerance vs f32 ref.
    assert jnp.allclose(out, ref, atol=5e-2, rtol=5e-2), (
        f"max abs diff {float(jnp.max(jnp.abs(out - ref)))}")

    # TODO(synk): saliency=True branch (output.backward() w.r.t. node features)
    # is a training-time gradient path, not part of the inference kernel.
    print("KERNEL_OK")
</pallas_src>

<mosaic_0001>
module attributes {stable_mosaic.version = 11 : i64} {
  func.func @_gcn_tile_kernel(%arg0: i32, %arg1: memref<64x64xbf16, #tpu.memory_space<vmem>>, %arg2: memref<64x128xbf16, #tpu.memory_space<vmem>>, %arg3: memref<128x128xbf16, #tpu.memory_space<vmem>>, %arg4: memref<1x128xf32, #tpu.memory_space<vmem>>, %arg5: memref<128x128xbf16, #tpu.memory_space<vmem>>, %arg6: memref<1x128xf32, #tpu.memory_space<vmem>>, %arg7: memref<128x128xbf16, #tpu.memory_space<vmem>>, %arg8: memref<1x128xf32, #tpu.memory_space<vmem>>, %arg9: memref<128x128xbf16, #tpu.memory_space<vmem>>, %arg10: memref<1x128xf32, #tpu.memory_space<vmem>>, %arg11: memref<8x128xf32, #tpu.memory_space<vmem>>) attributes {dimension_semantics = [#tpu.dimension_semantics<parallel>], iteration_bounds = array<i64: 2>, scalar_prefetch = 0 : i64, scratch_operands = 0 : i64, tpu.core_type = #tpu.core_type<tc>, window_params = [{transform_indices = @transform_0, window_bounds = array<i64: 64, 64>}, {transform_indices = @transform_1, window_bounds = array<i64: 64, 128>}, {pipeline_mode = #tpu.pipeline_mode<synchronous>, transform_indices = @transform_2, window_bounds = array<i64: 128, 128>}, {pipeline_mode = #tpu.pipeline_mode<synchronous>, transform_indices = @transform_3, window_bounds = array<i64: 1, 128>}, {pipeline_mode = #tpu.pipeline_mode<synchronous>, transform_indices = @transform_4, window_bounds = array<i64: 128, 128>}, {pipeline_mode = #tpu.pipeline_mode<synchronous>, transform_indices = @transform_5, window_bounds = array<i64: 1, 128>}, {pipeline_mode = #tpu.pipeline_mode<synchronous>, transform_indices = @transform_6, window_bounds = array<i64: 128, 128>}, {pipeline_mode = #tpu.pipeline_mode<synchronous>, transform_indices = @transform_7, window_bounds = array<i64: 1, 128>}, {pipeline_mode = #tpu.pipeline_mode<synchronous>, transform_indices = @transform_8, window_bounds = array<i64: 128, 128>}, {pipeline_mode = #tpu.pipeline_mode<synchronous>, transform_indices = @transform_9, window_bounds = array<i64: 1, 128>}, {transform_indices = @transform_10, window_bounds = array<i64: 8, 128>}]} {
    %c0 = arith.constant 0 : index
    %c0_0 = arith.constant 0 : index
    %0 = vector.load %arg1[%c0, %c0_0] : memref<64x64xbf16, #tpu.memory_space<vmem>>, vector<64x64xbf16>
    %c0_1 = arith.constant 0 : index
    %c0_2 = arith.constant 0 : index
    %1 = vector.load %arg2[%c0_1, %c0_2] : memref<64x128xbf16, #tpu.memory_space<vmem>>, vector<64x128xbf16>
    %cst = arith.constant dense<0.000000e+00> : vector<64x128xf32>
    %2 = tpu.matmul %0, %1, %cst {dimension_numbers = #tpu.dot_dimension_numbers<[1], [0], [0], [1], [0, 0, 1, 1], [], []>} : vector<64x64xbf16>, vector<64x128xbf16>, vector<64x128xf32> -> vector<64x128xf32>
    %3 = arith.truncf %2 : vector<64x128xf32> to vector<64x128xbf16>
    %c0_3 = arith.constant 0 : index
    %c0_4 = arith.constant 0 : index
    %4 = vector.load %arg3[%c0_3, %c0_4] : memref<128x128xbf16, #tpu.memory_space<vmem>>, vector<128x128xbf16>
    %cst_5 = arith.constant dense<0.000000e+00> : vector<64x128xf32>
    %5 = tpu.matmul %3, %4, %cst_5 {dimension_numbers = #tpu.dot_dimension_numbers<[1], [0], [0], [1], [0, 0, 1, 1], [], []>} : vector<64x128xbf16>, vector<128x128xbf16>, vector<64x128xf32> -> vector<64x128xf32>
    %c0_6 = arith.constant 0 : index
    %c0_7 = arith.constant 0 : index
    %6 = vector.load %arg4[%c0_6, %c0_7] : memref<1x128xf32, #tpu.memory_space<vmem>>, vector<1x128xf32>
    %7 = vector.broadcast %6 : vector<1x128xf32> to vector<64x128xf32>
    %8 = arith.addf %5, %7 : vector<64x128xf32>
    %cst_8 = arith.constant 0.000000e+00 : f32
    %9 = vector.broadcast %cst_8 : f32 to vector<64x128xf32>
    %10 = arith.maximumf %8, %9 : vector<64x128xf32>
    %11 = arith.truncf %10 : vector<64x128xf32> to vector<64x128xbf16>
    %c0_9 = arith.constant 0 : index
    %c0_10 = arith.constant 0 : index
    %12 = vector.load %arg5[%c0_9, %c0_10] : memref<128x128xbf16, #tpu.memory_space<vmem>>, vector<128x128xbf16>
    %cst_11 = arith.constant dense<0.000000e+00> : vector<64x128xf32>
    %13 = tpu.matmul %11, %12, %cst_11 {dimension_numbers = #tpu.dot_dimension_numbers<[1], [0], [0], [1], [0, 0, 1, 1], [], []>} : vector<64x128xbf16>, vector<128x128xbf16>, vector<64x128xf32> -> vector<64x128xf32>
    %14 = arith.truncf %13 : vector<64x128xf32> to vector<64x128xbf16>
    %cst_12 = arith.constant dense<0.000000e+00> : vector<64x128xf32>
    %15 = tpu.matmul %0, %14, %cst_12 {dimension_numbers = #tpu.dot_dimension_numbers<[1], [0], [0], [1], [0, 0, 1, 1], [], []>} : vector<64x64xbf16>, vector<64x128xbf16>, vector<64x128xf32> -> vector<64x128xf32>
    %c0_13 = arith.constant 0 : index
    %c0_14 = arith.constant 0 : index
    %16 = vector.load %arg6[%c0_13, %c0_14] : memref<1x128xf32, #tpu.memory_space<vmem>>, vector<1x128xf32>
    %17 = vector.broadcast %16 : vector<1x128xf32> to vector<64x128xf32>
    %18 = arith.addf %15, %17 : vector<64x128xf32>
    %cst_15 = arith.constant 0.000000e+00 : f32
    %19 = vector.broadcast %cst_15 : f32 to vector<64x128xf32>
    %20 = arith.maximumf %18, %19 : vector<64x128xf32>
    %21 = vector.shape_cast %20 : vector<64x128xf32> to vector<8x8x128xf32>
    %cst_16 = arith.constant dense<0.000000e+00> : vector<8x128xf32>
    %22 = vector.multi_reduction <add>, %21, %cst_16 [1] : vector<8x8x128xf32> to vector<8x128xf32>
    %cst_17 = arith.constant 1.250000e-01 : f32
    %23 = vector.broadcast %cst_17 : f32 to vector<8x128xf32>
    %24 = arith.mulf %22, %23 : vector<8x128xf32>
    %25 = arith.truncf %24 : vector<8x128xf32> to vector<8x128xbf16>
    %c0_18 = arith.constant 0 : index
    %c0_19 = arith.constant 0 : index
    %26 = vector.load %arg7[%c0_18, %c0_19] : memref<128x128xbf16, #tpu.memory_space<vmem>>, vector<128x128xbf16>
    %cst_20 = arith.constant dense<0.000000e+00> : vector<8x128xf32>
    %27 = tpu.matmul %25, %26, %cst_20 {dimension_numbers = #tpu.dot_dimension_numbers<[1], [0], [0], [1], [0, 0, 1, 1], [], []>} : vector<8x128xbf16>, vector<128x128xbf16>, vector<8x128xf32> -> vector<8x128xf32>
    %c0_21 = arith.constant 0 : index
    %c0_22 = arith.constant 0 : index
    %28 = vector.load %arg8[%c0_21, %c0_22] : memref<1x128xf32, #tpu.memory_space<vmem>>, vector<1x128xf32>
    %29 = vector.broadcast %28 : vector<1x128xf32> to vector<8x128xf32>
    %30 = arith.addf %27, %29 : vector<8x128xf32>
    %cst_23 = arith.constant 0.000000e+00 : f32
    %31 = vector.broadcast %cst_23 : f32 to vector<8x128xf32>
    %32 = arith.maximumf %30, %31 : vector<8x128xf32>
    %33 = arith.truncf %32 : vector<8x128xf32> to vector<8x128xbf16>
    %c0_24 = arith.constant 0 : index
    %c0_25 = arith.constant 0 : index
    %34 = vector.load %arg9[%c0_24, %c0_25] : memref<128x128xbf16, #tpu.memory_space<vmem>>, vector<128x128xbf16>
    %cst_26 = arith.constant dense<0.000000e+00> : vector<8x128xf32>
    %35 = tpu.matmul %33, %34, %cst_26 {dimension_numbers = #tpu.dot_dimension_numbers<[1], [0], [0], [1], [0, 0, 1, 1], [], []>} : vector<8x128xbf16>, vector<128x128xbf16>, vector<8x128xf32> -> vector<8x128xf32>
    %c0_27 = arith.constant 0 : index
    %c0_28 = arith.constant 0 : index
    %36 = vector.load %arg10[%c0_27, %c0_28] : memref<1x128xf32, #tpu.memory_space<vmem>>, vector<1x128xf32>
    %37 = vector.broadcast %36 : vector<1x128xf32> to vector<8x128xf32>
    %38 = arith.addf %35, %37 : vector<8x128xf32>
    %c0_29 = arith.constant 0 : index
    %c0_30 = arith.constant 0 : index
    %39 = vector.load %arg11[%c0_29, %c0_30] : memref<8x128xf32, #tpu.memory_space<vmem>>, vector<8x128xf32>
    tpu.vector_store %arg11[%c0_29, %c0_30], %38 {strides = array<i32>} : memref<8x128xf32, #tpu.memory_space<vmem>>, vector<8x128xf32>,
    return
  }
  func.func @transform_0(%arg0: i32) -> (i32, i32) {
    %c0_i32 = arith.constant 0 : i32
    %c0_i32_0 = arith.constant 0 : i32
    return %arg0, %c0_i32 : i32, i32
  }
  func.func @transform_1(%arg0: i32) -> (i32, i32) {
    %c0_i32 = arith.constant 0 : i32
    %c0_i32_0 = arith.constant 0 : i32
    return %arg0, %c0_i32 : i32, i32
  }
  func.func @transform_2(%arg0: i32) -> (i32, i32) {
    %c0_i32 = arith.constant 0 : i32
    %c0_i32_0 = arith.constant 0 : i32
    %c0_i32_1 = arith.constant 0 : i32
    return %c0_i32, %c0_i32_0 : i32, i32
  }
  func.func @transform_3(%arg0: i32) -> (i32, i32) {
    %c0_i32 = arith.constant 0 : i32
    %c0_i32_0 = arith.constant 0 : i32
    %c0_i32_1 = arith.constant 0 : i32
    return %c0_i32, %c0_i32_0 : i32, i32
  }
  func.func @transform_4(%arg0: i32) -> (i32, i32) {
    %c0_i32 = arith.constant 0 : i32
    %c0_i32_0 = arith.constant 0 : i32
    %c0_i32_1 = arith.constant 0 : i32
    return %c0_i32, %c0_i32_0 : i32, i32
  }
  func.func @transform_5(%arg0: i32) -> (i32, i32) {
    %c0_i32 = arith.constant 0 : i32
    %c0_i32_0 = arith.constant 0 : i32
    %c0_i32_1 = arith.constant 0 : i32
    return %c0_i32, %c0_i32_0 : i32, i32
  }
  func.func @transform_6(%arg0: i32) -> (i32, i32) {
    %c0_i32 = arith.constant 0 : i32
    %c0_i32_0 = arith.constant 0 : i32
    %c0_i32_1 = arith.constant 0 : i32
    return %c0_i32, %c0_i32_0 : i32, i32
  }
  func.func @transform_7(%arg0: i32) -> (i32, i32) {
    %c0_i32 = arith.constant 0 : i32
    %c0_i32_0 = arith.constant 0 : i32
    %c0_i32_1 = arith.constant 0 : i32
    return %c0_i32, %c0_i32_0 : i32, i32
  }
  func.func @transform_8(%arg0: i32) -> (i32, i32) {
    %c0_i32 = arith.constant 0 : i32
    %c0_i32_0 = arith.constant 0 : i32
    %c0_i32_1 = arith.constant 0 : i32
    return %c0_i32, %c0_i32_0 : i32, i32
  }
  func.func @transform_9(%arg0: i32) -> (i32, i32) {
    %c0_i32 = arith.constant 0 : i32
    %c0_i32_0 = arith.constant 0 : i32
    %c0_i32_1 = arith.constant 0 : i32
    return %c0_i32, %c0_i32_0 : i32, i32
  }
  func.func @transform_10(%arg0: i32) -> (i32, i32) {
    %c0_i32 = arith.constant 0 : i32
    %c0_i32_0 = arith.constant 0 : i32
    return %arg0, %c0_i32 : i32, i32
  }
}

</mosaic_0001>

<llo_original>
// kernel: gcn_reg_1mlp_forward.1
$region0: #{gcn_reg_1mlp_forward.1}
  #allocation0 [shape = 'u32[]', space=smem, size = 0x4, offset = 0x4, fixed_abs, tag = 'smem constant byte address 0x4 - core index']
  #allocation1 [shape = 'u32[144,128]{1,0:T(1,128)}', space=vmem, size = 0x12000, scoped, tag = 'internal scratch']
  %s0 = inlined_call_operand.vmem [shape: bf16[128,64], index: 0, kind: input, shape index: {}]
  %s1 = inlined_call_operand.vmem [shape: bf16[128,128], index: 1, kind: input, shape index: {}]
  %s2 = inlined_call_operand.vmem [shape: bf16[128,128], index: 2, kind: input, shape index: {}]
  %s3 = inlined_call_operand.vmem [shape: f32[1,128], index: 3, kind: input, shape index: {}]
  %s4 = inlined_call_operand.vmem [shape: bf16[128,128], index: 4, kind: input, shape index: {}]
  %s5 = inlined_call_operand.vmem [shape: f32[1,128], index: 5, kind: input, shape index: {}]
  %s6 = inlined_call_operand.vmem [shape: bf16[128,128], index: 6, kind: input, shape index: {}]
  %s7 = inlined_call_operand.vmem [shape: f32[1,128], index: 7, kind: input, shape index: {}]
  %s8 = inlined_call_operand.vmem [shape: bf16[128,128], index: 8, kind: input, shape index: {}]
  %s9 = inlined_call_operand.vmem [shape: f32[1,128], index: 9, kind: input, shape index: {}]
  %s10 = inlined_call_operand.vmem [shape: f32[16,128], index: 10, kind: output, shape index: {}]
  %s11 = sld [smem:[#allocation0]]
  $region73: #{gcn_reg_1mlp_forward.1} parent=0
    _
  %s13 = ssub.s32 1, %s11
  %s14 = scalar_select 0, %s13, %s11
  loop: start=0, step=1, limit=4
  $region2: #{gcn_reg_1mlp_forward.1} parent=0 // loop_pre_header
    _
  $region3: #{gcn_reg_1mlp_forward.1} parent=0 // loop_header
    %s16 = sphi 0, %s20
    %p17 = scmp.ge.s32.totalorder %s16, 4
    %s26 = sphi 0, %s28
    %s29 = sphi 0, %s26
    %s30 = sphi 0, %s29
    %s46 = sphi 0, %s30
    %s52 = sphi 0, %s54
    %s55 = sphi 0, %s52
    %s56 = sphi 0, %s55
    %s72 = sphi 0, %s56
    %s76 = sphi 0, %s76
    %s78 = sphi 0, %s76
    %s79 = sphi 0, %s78
    %s93 = sphi 0, %s79
    %s97 = sphi 0, %s97
    %s99 = sphi 0, %s97
    %s100 = sphi 0, %s99
    %s114 = sphi 0, %s100
    %s118 = sphi 0, %s118
    %s120 = sphi 0, %s118
    %s121 = sphi 0, %s120
    %s135 = sphi 0, %s121
    %s139 = sphi 0, %s139
    %s141 = sphi 0, %s139
    %s142 = sphi 0, %s141
    %s156 = sphi 0, %s142
    %s160 = sphi 0, %s160
    %s162 = sphi 0, %s160
    %s163 = sphi 0, %s162
    %s177 = sphi 0, %s163
    %s181 = sphi 0, %s181
    %s183 = sphi 0, %s181
    %s184 = sphi 0, %s183
    %s198 = sphi 0, %s184
    %s202 = sphi 0, %s202
    %s204 = sphi 0, %s202
    %s205 = sphi 0, %s204
    %s219 = sphi 0, %s205
    %s223 = sphi 0, %s223
    %s225 = sphi 0, %s223
    %s226 = sphi 0, %s225
    %s240 = sphi 0, %s226
    %s246 = sphi 0, %s248
    %s249 = sphi 0, %s246
    %s250 = sphi 0, %s249
    %s266 = sphi 0, %s250
  $region4: #{gcn_reg_1mlp_forward.1} parent=0 // loop_header_branch
    %19 = sbr.rel (%p17) target = $region8
  $region5: #{gcn_reg_1mlp_forward.1} parent=0 // loop_body
    %s21 = ssub.s32 %s16, 1
    %s22 = ssub.s32 %s16, 2
    %s23 = sadd.s32 %s16, 1
    %s24 = ssub.s32 %s16, %s23
    %p25 = scmp.eq.s32.totalorder %s24, 0
    %s27 = sadd.s32 %s26, 1
    %s28 = scalar_select %p25, %s26, %s27
    %p31 = pneg %p25
    %p32 = scmp.eq.s32.totalorder %s16, 1
    %p33 = por %p31, %p32
    %p34 = scmp.ne.s32.totalorder %s26, %s29
    %p35 = scmp.eq.s32.totalorder %s16, 0
    %p36 = por %p34, %p35
    %p37 = scmp.ne.s32.totalorder %s26, %s29
    %p38 = scmp.eq.s32.totalorder %s21, 1
    %p39 = por %p37, %p38
    %p40 = scmp.ne.s32.totalorder %s29, %s30
    %p41 = scmp.eq.s32.totalorder %s21, 0
    %p42 = por %p40, %p41
    %p43 = scmp.ne.s32.totalorder %s29, %s30
    %p44 = scmp.eq.s32.totalorder %s22, 1
    %p45 = por %p43, %p44
    %p47 = scmp.ne.s32.totalorder %s30, %s46
    %p48 = scmp.eq.s32.totalorder %s22, 0
    %p49 = por %p47, %p48
    %s50 = ssub.s32 %s16, %s23
    %p51 = scmp.eq.s32.totalorder %s50, 0
    %s53 = sadd.s32 %s52, 1
    %s54 = scalar_select %p51, %s52, %s53
    %p57 = pneg %p51
    %p58 = scmp.eq.s32.totalorder %s16, 1
    %p59 = por %p57, %p58
    %p60 = scmp.ne.s32.totalorder %s52, %s55
    %p61 = scmp.eq.s32.totalorder %s16, 0
    %p62 = por %p60, %p61
    %p63 = scmp.ne.s32.totalorder %s52, %s55
    %p64 = scmp.eq.s32.totalorder %s21, 1
    %p65 = por %p63, %p64
    %p66 = scmp.ne.s32.totalorder %s55, %s56
    %p67 = scmp.eq.s32.totalorder %s21, 0
    %p68 = por %p66, %p67
    %p69 = scmp.ne.s32.totalorder %s55, %s56
    %p70 = scmp.eq.s32.totalorder %s22, 1
    %p71 = por %p69, %p70
    %p73 = scmp.ne.s32.totalorder %s56, %s72
    %p74 = scmp.eq.s32.totalorder %s22, 0
    %p75 = por %p73, %p74
    %s77 = sadd.s32 %s76, 1
    %p80 = scmp.eq.s32.totalorder %s16, 1
    %p81 = scmp.ne.s32.totalorder %s76, %s78
    %p82 = scmp.eq.s32.totalorder %s16, 0
    %p83 = por %p81, %p82
    %p84 = scmp.ne.s32.totalorder %s76, %s78
    %p85 = scmp.eq.s32.totalorder %s21, 1
    %p86 = por %p84, %p85
    %p87 = scmp.ne.s32.totalorder %s78, %s79
    %p88 = scmp.eq.s32.totalorder %s21, 0
    %p89 = por %p87, %p88
    %p90 = scmp.ne.s32.totalorder %s78, %s79
    %p91 = scmp.eq.s32.totalorder %s22, 1
    %p92 = por %p90, %p91
    %p94 = scmp.ne.s32.totalorder %s79, %s93
    %p95 = scmp.eq.s32.totalorder %s22, 0
    %p96 = por %p94, %p95
    %s98 = sadd.s32 %s97, 1
    %p101 = scmp.eq.s32.totalorder %s16, 1
    %p102 = scmp.ne.s32.totalorder %s97, %s99
    %p103 = scmp.eq.s32.totalorder %s16, 0
    %p104 = por %p102, %p103
    %p105 = scmp.ne.s32.totalorder %s97, %s99
    %p106 = scmp.eq.s32.totalorder %s21, 1
    %p107 = por %p105, %p106
    %p108 = scmp.ne.s32.totalorder %s99, %s100
    %p109 = scmp.eq.s32.totalorder %s21, 0
    %p110 = por %p108, %p109
    %p111 = scmp.ne.s32.totalorder %s99, %s100
    %p112 = scmp.eq.s32.totalorder %s22, 1
    %p113 = por %p111, %p112
    %p115 = scmp.ne.s32.totalorder %s100, %s114
    %p116 = scmp.eq.s32.totalorder %s22, 0
    %p117 = por %p115, %p116
    %s119 = sadd.s32 %s118, 1
    %p122 = scmp.eq.s32.totalorder %s16, 1
    %p123 = scmp.ne.s32.totalorder %s118, %s120
    %p124 = scmp.eq.s32.totalorder %s16, 0
    %p125 = por %p123, %p124
    %p126 = scmp.ne.s32.totalorder %s118, %s120
    %p127 = scmp.eq.s32.totalorder %s21, 1
    %p128 = por %p126, %p127
    %p129 = scmp.ne.s32.totalorder %s120, %s121
    %p130 = scmp.eq.s32.totalorder %s21, 0
    %p131 = por %p129, %p130
    %p132 = scmp.ne.s32.totalorder %s120, %s121
    %p133 = scmp.eq.s32.totalorder %s22, 1
    %p134 = por %p132, %p133
    %p136 = scmp.ne.s32.totalorder %s121, %s135
    %p137 = scmp.eq.s32.totalorder %s22, 0
    %p138 = por %p136, %p137
    %s140 = sadd.s32 %s139, 1
    %p143 = scmp.eq.s32.totalorder %s16, 1
    %p144 = scmp.ne.s32.totalorder %s139, %s141
    %p145 = scmp.eq.s32.totalorder %s16, 0
    %p146 = por %p144, %p145
    %p147 = scmp.ne.s32.totalorder %s139, %s141
    %p148 = scmp.eq.s32.totalorder %s21, 1
    %p149 = por %p147, %p148
    %p150 = scmp.ne.s32.totalorder %s141, %s142
    %p151 = scmp.eq.s32.totalorder %s21, 0
    %p152 = por %p150, %p151
    %p153 = scmp.ne.s32.totalorder %s141, %s142
    %p154 = scmp.eq.s32.totalorder %s22, 1
    %p155 = por %p153, %p154
    %p157 = scmp.ne.s32.totalorder %s142, %s156
    %p158 = scmp.eq.s32.totalorder %s22, 0
    %p159 = por %p157, %p158
    %s161 = sadd.s32 %s160, 1
    %p164 = scmp.eq.s32.totalorder %s16, 1
    %p165 = scmp.ne.s32.totalorder %s160, %s162
    %p166 = scmp.eq.s32.totalorder %s16, 0
    %p167 = por %p165, %p166
    %p168 = scmp.ne.s32.totalorder %s160, %s162
    %p169 = scmp.eq.s32.totalorder %s21, 1
    %p170 = por %p168, %p169
    %p171 = scmp.ne.s32.totalorder %s162, %s163
    %p172 = scmp.eq.s32.totalorder %s21, 0
    %p173 = por %p171, %p172
    %p174 = scmp.ne.s32.totalorder %s162, %s163
    %p175 = scmp.eq.s32.totalorder %s22, 1
    %p176 = por %p174, %p175
    %p178 = scmp.ne.s32.totalorder %s163, %s177
    %p179 = scmp.eq.s32.totalorder %s22, 0
    %p180 = por %p178, %p179
    %s182 = sadd.s32 %s181, 1
    %p185 = scmp.eq.s32.totalorder %s16, 1
    %p186 = scmp.ne.s32.totalorder %s181, %s183
    %p187 = scmp.eq.s32.totalorder %s16, 0
    %p188 = por %p186, %p187
    %p189 = scmp.ne.s32.totalorder %s181, %s183
    %p190 = scmp.eq.s32.totalorder %s21, 1
    %p191 = por %p189, %p190
    %p192 = scmp.ne.s32.totalorder %s183, %s184
    %p193 = scmp.eq.s32.totalorder %s21, 0
    %p194 = por %p192, %p193
    %p195 = scmp.ne.s32.totalorder %s183, %s184
    %p196 = scmp.eq.s32.totalorder %s22, 1
    %p197 = por %p195, %p196
    %p199 = scmp.ne.s32.totalorder %s184, %s198
    %p200 = scmp.eq.s32.totalorder %s22, 0
    %p201 = por %p199, %p200
    %s203 = sadd.s32 %s202, 1
    %p206 = scmp.eq.s32.totalorder %s16, 1
    %p207 = scmp.ne.s32.totalorder %s202, %s204
    %p208 = scmp.eq.s32.totalorder %s16, 0
    %p209 = por %p207, %p208
    %p210 = scmp.ne.s32.totalorder %s202, %s204
    %p211 = scmp.eq.s32.totalorder %s21, 1
    %p212 = por %p210, %p211
    %p213 = scmp.ne.s32.totalorder %s204, %s205
    %p214 = scmp.eq.s32.totalorder %s21, 0
    %p215 = por %p213, %p214
    %p216 = scmp.ne.s32.totalorder %s204, %s205
    %p217 = scmp.eq.s32.totalorder %s22, 1
    %p218 = por %p216, %p217
    %p220 = scmp.ne.s32.totalorder %s205, %s219
    %p221 = scmp.eq.s32.totalorder %s22, 0
    %p222 = por %p220, %p221
    %s224 = sadd.s32 %s223, 1
    %p227 = scmp.eq.s32.totalorder %s16, 1
    %p228 = scmp.ne.s32.totalorder %s223, %s225
    %p229 = scmp.eq.s32.totalorder %s16, 0
    %p230 = por %p228, %p229
    %p231 = scmp.ne.s32.totalorder %s223, %s225
    %p232 = scmp.eq.s32.totalorder %s21, 1
    %p233 = por %p231, %p232
    %p234 = scmp.ne.s32.totalorder %s225, %s226
    %p235 = scmp.eq.s32.totalorder %s21, 0
    %p236 = por %p234, %p235
    %p237 = scmp.ne.s32.totalorder %s225, %s226
    %p238 = scmp.eq.s32.totalorder %s22, 1
    %p239 = por %p237, %p238
    %p241 = scmp.ne.s32.totalorder %s226, %s240
    %p242 = scmp.eq.s32.totalorder %s22, 0
    %p243 = por %p241, %p242
    %s244 = ssub.s32 %s16, %s23
    %p245 = scmp.eq.s32.totalorder %s244, 0
    %s247 = sadd.s32 %s246, 1
    %s248 = scalar_select %p245, %s246, %s247
    %p251 = pneg %p245
    %p252 = scmp.eq.s32.totalorder %s16, 1
    %p253 = por %p251, %p252
    %p254 = scmp.ne.s32.totalorder %s246, %s249
    %p255 = scmp.eq.s32.totalorder %s16, 0
    %p256 = por %p254, %p255
    %p257 = scmp.ne.s32.totalorder %s246, %s249
    %p258 = scmp.eq.s32.totalorder %s21, 1
    %p259 = por %p257, %p258
    %p260 = scmp.ne.s32.totalorder %s249, %s250
    %p261 = scmp.eq.s32.totalorder %s21, 0
    %p262 = por %p260, %p261
    %p263 = scmp.ne.s32.totalorder %s249, %s250
    %p264 = scmp.eq.s32.totalorder %s22, 1
    %p265 = por %p263, %p264
    %p267 = scmp.ne.s32.totalorder %s250, %s266
    %p268 = scmp.eq.s32.totalorder %s22, 0
    %p269 = por %p267, %p268
    %p270 = scmp.le.s32.totalorder 1, %s16
    %p271 = scmp.lt.s32.totalorder %s16, 3
    %p272 = pnand %p270, %p271
    %p273 = pneg %p272
    // Predicated region
    $region9: #{gcn_reg_1mlp_forward.1} parent=5 // pred_check
      _
    $region10: #{gcn_reg_1mlp_forward.1} parent=5 // pred_check_branch
      %275 = sbr.rel (%p272) target = $region12
    $region11: #{gcn_reg_1mlp_forward.1} parent=5 // pred_region
      %s276 = ssub.s32 %s16, 1
      // Predicated region
      $region13: #{gcn_reg_1mlp_forward.1} parent=11 // pred_check
        %p277 = pneg %p89
      $region14: #{gcn_reg_1mlp_forward.1} parent=11 // pred_check_branch
        %279 = sbr.rel (%p277) target = $region16
      $region15: #{gcn_reg_1mlp_forward.1} parent=11 // pred_region
        _
      $region16: #{gcn_reg_1mlp_forward.1} parent=11 // pred_fallthru
        _
      // Predicated region
      $region17: #{gcn_reg_1mlp_forward.1} parent=11 // pred_check
        %p280 = pneg %p110
      $region18: #{gcn_reg_1mlp_forward.1} parent=11 // pred_check_branch
        %282 = sbr.rel (%p280) target = $region20
      $region19: #{gcn_reg_1mlp_forward.1} parent=11 // pred_region
        _
      $region20: #{gcn_reg_1mlp_forward.1} parent=11 // pred_fallthru
        _
      // Predicated region
      $region21: #{gcn_reg_1mlp_forward.1} parent=11 // pred_check
        %p283 = pneg %p131
      $region22: #{gcn_reg_1mlp_forward.1} parent=11 // pred_check_branch
        %285 = sbr.rel (%p283) target = $region24
      $region23: #{gcn_reg_1mlp_forward.1} parent=11 // pred_region
        _
      $region24: #{gcn_reg_1mlp_forward.1} parent=11 // pred_fallthru
        _
      // Predicated region
      $region25: #{gcn_reg_1mlp_forward.1} parent=11 // pred_check
        %p286 = pneg %p152
      $region26: #{gcn_reg_1mlp_forward.1} parent=11 // pred_check_branch
        %288 = sbr.rel (%p286) target = $region28
      $region27: #{gcn_reg_1mlp_forward.1} parent=11 // pred_region
        _
      $region28: #{gcn_reg_1mlp_forward.1} parent=11 // pred_fallthru
        _
      // Predicated region
      $region29: #{gcn_reg_1mlp_forward.1} parent=11 // pred_check
        %p289 = pneg %p173
      $region30: #{gcn_reg_1mlp_forward.1} parent=11 // pred_check_branch
        %291 = sbr.rel (%p289) target = $region32
      $region31: #{gcn_reg_1mlp_forward.1} parent=11 // pred_region
        _
      $region32: #{gcn_reg_1mlp_forward.1} parent=11 // pred_fallthru
        _
      // Predicated region
      $region33: #{gcn_reg_1mlp_forward.1} parent=11 // pred_check
        %p292 = pneg %p194
      $region34: #{gcn_reg_1mlp_forward.1} parent=11 // pred_check_branch
        %294 = sbr.rel (%p292) target = $region36
      $region35: #{gcn_reg_1mlp_forward.1} parent=11 // pred_region
        _
      $region36: #{gcn_reg_1mlp_forward.1} parent=11 // pred_fallthru
        _
      // Predicated region
      $region37: #{gcn_reg_1mlp_forward.1} parent=11 // pred_check
        %p295 = pneg %p215
      $region38: #{gcn_reg_1mlp_forward.1} parent=11 // pred_check_branch
        %297 = sbr.rel (%p295) target = $region40
      $region39: #{gcn_reg_1mlp_forward.1} parent=11 // pred_region
        _
      $region40: #{gcn_reg_1mlp_forward.1} parent=11 // pred_fallthru
        _
      // Predicated region
      $region41: #{gcn_reg_1mlp_forward.1} parent=11 // pred_check
        %p298 = pneg %p236
      $region42: #{gcn_reg_1mlp_forward.1} parent=11 // pred_check_branch
        %300 = sbr.rel (%p298) target = $region44
      $region43: #{gcn_reg_1mlp_forward.1} parent=11 // pred_region
        _
      $region44: #{gcn_reg_1mlp_forward.1} parent=11 // pred_fallthru
        _
    $region12: #{gcn_reg_1mlp_forward.1} parent=5 // pred_fallthru
      _
    %p301 = scmp.lt.s32.totalorder %s16, 2
    // Predicated region
    $region45: #{gcn_reg_1mlp_forward.1} parent=5 // pred_check
      %p302 = pneg %p301
    $region46: #{gcn_reg_1mlp_forward.1} parent=5 // pred_check_branch
      %304 = sbr.rel (%p302) target = $region48
    $region47: #{gcn_reg_1mlp_forward.1} parent=5 // pred_region
      // Predicated region
      $region49: #{gcn_reg_1mlp_forward.1} parent=47 // pred_check
        %p305 = pneg %p36
      $region50: #{gcn_reg_1mlp_forward.1} parent=47 // pred_check_branch
        %307 = sbr.rel (%p305) target = $region52
      $region51: #{gcn_reg_1mlp_forward.1} parent=47 // pred_region
        %s308 = smul.u32 8, %s16
        %p309 = scmp.lt.s32.totalorder %s308, 15
        %s310 = scalar_select %p309, %s308, 15
        %s311 = smul.addr %s310, 4
        %s312 = scalar_lea.vmem %s0, %s311
        %s313 = smul.u32 8, %s16
      $region52: #{gcn_reg_1mlp_forward.1} parent=47 // pred_fallthru
        _
      // Predicated region
      $region53: #{gcn_reg_1mlp_forward.1} parent=47 // pred_check
        %p314 = pneg %p62
      $region54: #{gcn_reg_1mlp_forward.1} parent=47 // pred_check_branch
        %316 = sbr.rel (%p314) target = $region56
      $region55: #{gcn_reg_1mlp_forward.1} parent=47 // pred_region
        %s317 = smul.u32 8, %s16
        %p318 = scmp.lt.s32.totalorder %s317, 15
        %s319 = scalar_select %p318, %s317, 15
        %s320 = smul.addr %s319, 4
        %s321 = scalar_lea.vmem %s1, %s320
        %s322 = smul.u32 8, %s16
      $region56: #{gcn_reg_1mlp_forward.1} parent=47 // pred_fallthru
        _
    $region48: #{gcn_reg_1mlp_forward.1} parent=5 // pred_fallthru
      _
    %p323 = scmp.le.s32.totalorder 1, %s16
    %p324 = scmp.lt.s32.totalorder %s16, 3
    %p325 = pnand %p323, %p324
    %p326 = pneg %p325
    // Predicated region
    $region57: #{gcn_reg_1mlp_forward.1} parent=5 // pred_check
      _
    $region58: #{gcn_reg_1mlp_forward.1} parent=5 // pred_check_branch
      %328 = sbr.rel (%p325) target = $region60
    $region59: #{gcn_reg_1mlp_forward.1} parent=5 // pred_region
      %s329 = ssub.s32 %s16, 1
      %s330 = smul.u32 8, %s21
      %p331 = scmp.lt.s32.totalorder %s330, 15
      %s332 = scalar_select %p331, %s330, 15
      %s333 = smul.addr %s332, 4
      %s334 = scalar_lea.vmem %s0, %s333
      %p335 = pneg %p42
      %p336 = pneg %p39
      %s337 = smul.u32 8, %s21
      %p338 = scmp.lt.s32.totalorder %s337, 15
      %s339 = scalar_select %p338, %s337, 15
      %s340 = smul.addr %s339, 4
      %s341 = scalar_lea.vmem %s1, %s340
      %p342 = pneg %p68
      %p343 = pneg %p65
      %p344 = pneg %p89
      %p345 = pneg %p86
      %p346 = pneg %p110
      %p347 = pneg %p107
      %p348 = pneg %p131
      %p349 = pneg %p128
      %p350 = pneg %p152
      %p351 = pneg %p149
      %p352 = pneg %p173
      %p353 = pneg %p170
      %p354 = pneg %p194
      %p355 = pneg %p191
      %p356 = pneg %p215
      %p357 = pneg %p212
      %p358 = pneg %p236
      %p359 = pneg %p233
      %p360 = pneg %p262
      %p361 = pneg %p259
      %p362 = scmp.lt.s32.totalorder %s21, 1
      %s363 = scalar_select %p362, %s21, 1
      %s364 = smul.addr %s363, 8
      %s365 = scalar_lea.vmem %s10, %s364
      %s366 = smul.u32 8, %s21
      %p367 = scmp.lt.s32.totalorder %s366, 15
      %s368 = scalar_select %p367, %s366, 15
      %s369 = smul.addr %s368, 4
      %s370 = scalar_lea.vmem %s0, %s369
      %s371 = smul.u32 8, %s21
      %s372 = smul.u32 8, %s21
      %p373 = scmp.lt.s32.totalorder %s372, 15
      %s374 = scalar_select %p373, %s372, 15
      %s375 = smul.addr %s374, 4
      %s376 = scalar_lea.vmem %s1, %s375
      %s377 = smul.u32 8, %s21
      %p378 = scmp.lt.s32.totalorder %s21, 1
      %s379 = scalar_select %p378, %s21, 1
      %s380 = smul.addr %s379, 8
      %s381 = scalar_lea.vmem %s10, %s380
      %v383 = vld [vmem:[%s370] sm:$0xf]
      %v384 = vld [vmem:[%s370 + $0x4] sm:$0xf]
      %v385 = vld [vmem:[%s370 + $0x8] sm:$0xf]
      %v386 = vld [vmem:[%s370 + $0xc] sm:$0xf]
      %v387 = vld [vmem:[%s370 + $0x10] sm:$0xf]
      %v388 = vld [vmem:[%s370 + $0x14] sm:$0xf]
      %v389 = vld [vmem:[%s370 + $0x18] sm:$0xf]
      %v390 = vld [vmem:[%s370 + $0x1c] sm:$0xf]
      %v391 = vld [vmem:[%s376] sm:$0xf]
      %v392 = vld [vmem:[%s376 + $0x4] sm:$0xf]
      %v393 = vld [vmem:[%s376 + $0x8] sm:$0xf]
      %v394 = vld [vmem:[%s376 + $0xc] sm:$0xf]
      %v395 = vld [vmem:[%s376 + $0x10] sm:$0xf]
      %v396 = vld [vmem:[%s376 + $0x14] sm:$0xf]
      %v397 = vld [vmem:[%s376 + $0x18] sm:$0xf]
      %v398 = vld [vmem:[%s376 + $0x1c] sm:$0xf]
      %v407 = vunpack.c.l.b16 %v383
      %v408 = vunpack.c.l.b16 %v384
      %v409 = vunpack.c.l.b16 %v385
      %v410 = vunpack.c.l.b16 %v386
      %v411 = vunpack.c.l.b16 %v387
      %v412 = vunpack.c.l.b16 %v388
      %v413 = vunpack.c.l.b16 %v389
      %v414 = vunpack.c.l.b16 %v390
      %v415 = vpack.c.b16 %v408, %v407
      %v416 = vpack.c.b16 %v410, %v409
      %v417 = vpack.c.b16 %v412, %v411
      %v418 = vpack.c.b16 %v414, %v413
      %v427 = vunpack.c.l.b16 %v391
      %v428 = vunpack.c.l.b16 %v392
      %v429 = vunpack.c.l.b16 %v393
      %v430 = vunpack.c.l.b16 %v394
      %v431 = vunpack.c.l.b16 %v395
      %v432 = vunpack.c.l.b16 %v396
      %v433 = vunpack.c.l.b16 %v397
      %v434 = vunpack.c.l.b16 %v398
      %v435 = vpack.c.b16 %v428, %v427
      %v436 = vpack.c.b16 %v430, %v429
      %v437 = vpack.c.b16 %v432, %v431
      %v438 = vpack.c.b16 %v434, %v433
      %vm443 = vcmask 523264
      %v445 = vsel %vm443, %v415, 0
      %v448 = vsel %vm443, %v416, 0
      %v451 = vsel %vm443, %v417, 0
      %v454 = vsel %vm443, %v418, 0
      %456 = vmatprep.subr.bf16.mxu0 0
      %457 = vmatpush1.bf16.msra.mxu0 0
      %458 = vmatprep.subr.bf16.mxu0 0
      %459 = vmatpush1.bf16.msra.mxu0 0
      %460 = vmatprep.subr.bf16.mxu0 0
      %461 = vmatpush1.bf16.msra.mxu0 0
      %462 = vmatprep.subr.bf16.mxu0 0
      %463 = vmatpush1.bf16.msra.mxu0 0
      %464 = vmatprep.subr.bf16.mxu0 0
      %465 = vmatpush1.bf16.msra.mxu0 %v438
      %466 = vmatprep.subr.bf16.mxu0 0
      %467 = vmatpush1.bf16.msra.mxu0 %v437
      %468 = vmatprep.subr.bf16.mxu0 0
      %469 = vmatpush1.bf16.msra.mxu0 %v436
      %470 = vmatprep.subr.bf16.mxu0 0
      %471 = vmatpush1.bf16.msra.mxu0 %v435
      %472 = vmatprep.subr.bf16.mxu0 0
      %473 = vmatpush2.bf16.msra.mxu0 0
      %474 = vmatprep.subr.bf16.mxu0 0
      %475 = vmatpush2.bf16.msra.mxu0 0
      %476 = vmatprep.subr.bf16.mxu0 0
      %477 = vmatpush2.bf16.msra.mxu0 0
      %478 = vmatprep.subr.bf16.mxu0 0
      %479 = vmatpush2.bf16.msra.mxu0 0
      %480 = vmatprep.subr.bf16.mxu0 0
      %481 = vmatpush2.bf16.msra.mxu0 0
      %482 = vmatprep.subr.bf16.mxu0 0
      %483 = vmatpush2.bf16.msra.mxu0 0
      %484 = vmatprep.subr.bf16.mxu0 0
      %485 = vmatpush2.bf16.msra.mxu0 0
      %486 = vmatprep.subr.bf16.mxu0 0
      %487 = vmatpush2.bf16.msra.mxu0 0
      %488 = vmatprep.mubr.bf16.mxu0 0
      %489 = vmatmul.mubr.bf16.gmra.mxu0 %v445
      %v490 = vpop.f32.mrf.mxu0
      %v491 = vadd.f32 0.0, %v490
      %v492 = vpop.f32.mrf.mxu0
      %v493 = vpop.f32.mrf.mxu0
      %v494 = vadd.f32 0.0, %v493
      %v495 = vpop.f32.mrf.mxu0
      %496 = vmatprep.mubr.bf16.mxu0 0
      %497 = vmatmul.mubr.bf16.gmra.mxu0 %v448
      %v498 = vpop.f32.mrf.mxu0
      %v499 = vadd.f32 0.0, %v498
      %v500 = vpop.f32.mrf.mxu0
      %v501 = vpop.f32.mrf.mxu0
      %v502 = vadd.f32 0.0, %v501
      %v503 = vpop.f32.mrf.mxu0
      %504 = vmatprep.mubr.bf16.mxu0 0
      %505 = vmatmul.mubr.bf16.gmra.mxu0 %v451
      %v506 = vpop.f32.mrf.mxu0
      %v507 = vadd.f32 0.0, %v506
      %v508 = vpop.f32.mrf.mxu0
      %v509 = vpop.f32.mrf.mxu0
      %v510 = vadd.f32 0.0, %v509
      %v511 = vpop.f32.mrf.mxu0
      %512 = vmatprep.mubr.bf16.mxu0 0
      %513 = vmatmul.mubr.bf16.gmra.mxu0 %v454
      %v514 = vpop.f32.mrf.mxu0
      %v515 = vadd.f32 0.0, %v514
      %v516 = vpop.f32.mrf.mxu0
      %v517 = vpop.f32.mrf.mxu0
      %v518 = vadd.f32 0.0, %v517
      %v519 = vpop.f32.mrf.mxu0
      %520 = vdwg.mxu0
      %v521 = vpack.c.bf16 %v494, %v491
      %v522 = vpack.c.bf16 %v502, %v499
      %v523 = vpack.c.bf16 %v510, %v507
      %v524 = vpack.c.bf16 %v518, %v515
      %v525 = vld [vmem:[%s2] sm:$0xf]
      %v526 = vld [vmem:[%s2 + $0x4] sm:$0xf]
      %v527 = vld [vmem:[%s2 + $0x8] sm:$0xf]
      %v528 = vld [vmem:[%s2 + $0xc] sm:$0xf]
      %v529 = vld [vmem:[%s2 + $0x10] sm:$0xf]
      %v530 = vld [vmem:[%s2 + $0x14] sm:$0xf]
      %v531 = vld [vmem:[%s2 + $0x18] sm:$0xf]
      %v532 = vld [vmem:[%s2 + $0x1c] sm:$0xf]
      %v533 = vld [vmem:[%s2 + $0x20] sm:$0xf]
      %v534 = vld [vmem:[%s2 + $0x24] sm:$0xf]
      %v535 = vld [vmem:[%s2 + $0x28] sm:$0xf]
      %v536 = vld [vmem:[%s2 + $0x2c] sm:$0xf]
      %v537 = vld [vmem:[%s2 + $0x30] sm:$0xf]
      %v538 = vld [vmem:[%s2 + $0x34] sm:$0xf]
      %v539 = vld [vmem:[%s2 + $0x38] sm:$0xf]
      %v540 = vld [vmem:[%s2 + $0x3c] sm:$0xf]
      %v541 = vld [vmem:[%s3] sm:$0x1]
      %v543 = vlaneseq
      %v544 = vshrl.u32 %v543, 7
      %v545 = vsub.s32 0, %v544
      %v546 = vrot.slane %v541, %v545
      %v564 = vunpack.c.l.b16 %v525
      %v565 = vunpack.c.l.b16 %v526
      %v566 = vunpack.c.l.b16 %v527
      %v567 = vunpack.c.l.b16 %v528
      %v568 = vunpack.c.l.b16 %v529
      %v569 = vunpack.c.l.b16 %v530
      %v570 = vunpack.c.l.b16 %v531
      %v571 = vunpack.c.l.b16 %v532
      %v572 = vunpack.c.l.b16 %v533
      %v573 = vunpack.c.l.b16 %v534
      %v574 = vunpack.c.l.b16 %v535
      %v575 = vunpack.c.l.b16 %v536
      %v576 = vunpack.c.l.b16 %v537
      %v577 = vunpack.c.l.b16 %v538
      %v578 = vunpack.c.l.b16 %v539
      %v579 = vunpack.c.l.b16 %v540
      %v580 = vpack.c.b16 %v565, %v564
      %v581 = vpack.c.b16 %v567, %v566
      %v582 = vpack.c.b16 %v569, %v568
      %v583 = vpack.c.b16 %v571, %v570
      %v584 = vpack.c.b16 %v573, %v572
      %v585 = vpack.c.b16 %v575, %v574
      %v586 = vpack.c.b16 %v577, %v576
      %v587 = vpack.c.b16 %v579, %v578
      %596 = vmatprep.subr.bf16.mxu0 0
      %597 = vmatpush1.bf16.msra.mxu0 %v587
      %598 = vmatprep.subr.bf16.mxu0 0
      %599 = vmatpush1.bf16.msra.mxu0 %v586
      %600 = vmatprep.subr.bf16.mxu0 0
      %601 = vmatpush1.bf16.msra.mxu0 %v585
      %602 = vmatprep.subr.bf16.mxu0 0
      %603 = vmatpush1.bf16.msra.mxu0 %v584
      %604 = vmatprep.subr.bf16.mxu0 0
      %605 = vmatpush1.bf16.msra.mxu0 %v583
      %606 = vmatprep.subr.bf16.mxu0 0
      %607 = vmatpush1.bf16.msra.mxu0 %v582
      %608 = vmatprep.subr.bf16.mxu0 0
      %609 = vmatpush1.bf16.msra.mxu0 %v581
      %610 = vmatprep.subr.bf16.mxu0 0
      %611 = vmatpush1.bf16.msra.mxu0 %v580
      %612 = vmatprep.subr.bf16.mxu0 0
      %613 = vmatpush2.bf16.msra.mxu0 0
      %614 = vmatprep.subr.bf16.mxu0 0
      %615 = vmatpush2.bf16.msra.mxu0 0
      %616 = vmatprep.subr.bf16.mxu0 0
      %617 = vmatpush2.bf16.msra.mxu0 0
      %618 = vmatprep.subr.bf16.mxu0 0
      %619 = vmatpush2.bf16.msra.mxu0 0
      %620 = vmatprep.subr.bf16.mxu0 0
      %621 = vmatpush2.bf16.msra.mxu0 0
      %622 = vmatprep.subr.bf16.mxu0 0
      %623 = vmatpush2.bf16.msra.mxu0 0
      %624 = vmatprep.subr.bf16.mxu0 0
      %625 = vmatpush2.bf16.msra.mxu0 0
      %626 = vmatprep.subr.bf16.mxu0 0
      %627 = vmatpush2.bf16.msra.mxu0 0
      %628 = vmatprep.mubr.bf16.mxu0 0
      %629 = vmatmul.mubr.bf16.gmra.mxu0 %v521
      %v630 = vpop.f32.mrf.mxu0
      %v631 = vadd.f32 %v546, %v630
      %v632 = vpop.f32.mrf.mxu0
      %v633 = vpop.f32.mrf.mxu0
      %v634 = vadd.f32 %v546, %v633
      %v635 = vpop.f32.mrf.mxu0
      %636 = vmatprep.mubr.bf16.mxu0 0
      %637 = vmatmul.mubr.bf16.gmra.mxu0 %v522
      %v638 = vpop.f32.mrf.mxu0
      %v639 = vadd.f32 %v546, %v638
      %v640 = vpop.f32.mrf.mxu0
      %v641 = vpop.f32.mrf.mxu0
      %v642 = vadd.f32 %v546, %v641
      %v643 = vpop.f32.mrf.mxu0
      %644 = vmatprep.mubr.bf16.mxu0 0
      %645 = vmatmul.mubr.bf16.gmra.mxu0 %v523
      %v646 = vpop.f32.mrf.mxu0
      %v647 = vadd.f32 %v546, %v646
      %v648 = vpop.f32.mrf.mxu0
      %v649 = vpop.f32.mrf.mxu0
      %v650 = vadd.f32 %v546, %v649
      %v651 = vpop.f32.mrf.mxu0
      %652 = vmatprep.mubr.bf16.mxu0 0
      %653 = vmatmul.mubr.bf16.gmra.mxu0 %v524
      %v654 = vpop.f32.mrf.mxu0
      %v655 = vadd.f32 %v546, %v654
      %v656 = vpop.f32.mrf.mxu0
      %v657 = vpop.f32.mrf.mxu0
      %v658 = vadd.f32 %v546, %v657
      %v659 = vpop.f32.mrf.mxu0
      %660 = vdwg.mxu0
      %v661 = vmax.f32 %v631, 0.0
      %v662 = vmax.f32 %v634, 0.0
      %v663 = vmax.f32 %v639, 0.0
      %v664 = vmax.f32 %v642, 0.0
      %v665 = vmax.f32 %v647, 0.0
      %v666 = vmax.f32 %v650, 0.0
      %v667 = vmax.f32 %v655, 0.0
      %v668 = vmax.f32 %v658, 0.0
      %v669 = vpack.c.bf16 %v662, %v661
      %v670 = vpack.c.bf16 %v664, %v663
      %v671 = vpack.c.bf16 %v666, %v665
      %v672 = vpack.c.bf16 %v668, %v667
      %v673 = vld [vmem:[%s4] sm:$0xf]
      %v674 = vld [vmem:[%s4 + $0x4] sm:$0xf]
      %v675 = vld [vmem:[%s4 + $0x8] sm:$0xf]
      %v676 = vld [vmem:[%s4 + $0xc] sm:$0xf]
      %v677 = vld [vmem:[%s4 + $0x10] sm:$0xf]
      %v678 = vld [vmem:[%s4 + $0x14] sm:$0xf]
      %v679 = vld [vmem:[%s4 + $0x18] sm:$0xf]
      %v680 = vld [vmem:[%s4 + $0x1c] sm:$0xf]
      %v681 = vld [vmem:[%s4 + $0x20] sm:$0xf]
      %v682 = vld [vmem:[%s4 + $0x24] sm:$0xf]
      %v683 = vld [vmem:[%s4 + $0x28] sm:$0xf]
      %v684 = vld [vmem:[%s4 + $0x2c] sm:$0xf]
      %v685 = vld [vmem:[%s4 + $0x30] sm:$0xf]
      %v686 = vld [vmem:[%s4 + $0x34] sm:$0xf]
      %v687 = vld [vmem:[%s4 + $0x38] sm:$0xf]
      %v688 = vld [vmem:[%s4 + $0x3c] sm:$0xf]
      %v705 = vunpack.c.l.b16 %v673
      %v706 = vunpack.c.l.b16 %v674
      %v707 = vunpack.c.l.b16 %v675
      %v708 = vunpack.c.l.b16 %v676
      %v709 = vunpack.c.l.b16 %v677
      %v710 = vunpack.c.l.b16 %v678
      %v711 = vunpack.c.l.b16 %v679
      %v712 = vunpack.c.l.b16 %v680
      %v713 = vunpack.c.l.b16 %v681
      %v714 = vunpack.c.l.b16 %v682
      %v715 = vunpack.c.l.b16 %v683
      %v716 = vunpack.c.l.b16 %v684
      %v717 = vunpack.c.l.b16 %v685
      %v718 = vunpack.c.l.b16 %v686
      %v719 = vunpack.c.l.b16 %v687
      %v720 = vunpack.c.l.b16 %v688
      %v721 = vpack.c.b16 %v706, %v705
      %v722 = vpack.c.b16 %v708, %v707
      %v723 = vpack.c.b16 %v710, %v709
      %v724 = vpack.c.b16 %v712, %v711
      %v725 = vpack.c.b16 %v714, %v713
      %v726 = vpack.c.b16 %v716, %v715
      %v727 = vpack.c.b16 %v718, %v717
      %v728 = vpack.c.b16 %v720, %v719
      %737 = vmatprep.subr.bf16.mxu0 0
      %738 = vmatpush1.bf16.msra.mxu0 %v728
      %739 = vmatprep.subr.bf16.mxu0 0
      %740 = vmatpush1.bf16.msra.mxu0 %v727
      %741 = vmatprep.subr.bf16.mxu0 0
      %742 = vmatpush1.bf16.msra.mxu0 %v726
      %743 = vmatprep.subr.bf16.mxu0 0
      %744 = vmatpush1.bf16.msra.mxu0 %v725
      %745 = vmatprep.subr.bf16.mxu0 0
      %746 = vmatpush1.bf16.msra.mxu0 %v724
      %747 = vmatprep.subr.bf16.mxu0 0
      %748 = vmatpush1.bf16.msra.mxu0 %v723
      %749 = vmatprep.subr.bf16.mxu0 0
      %750 = vmatpush1.bf16.msra.mxu0 %v722
      %751 = vmatprep.subr.bf16.mxu0 0
      %752 = vmatpush1.bf16.msra.mxu0 %v721
      %753 = vmatprep.subr.bf16.mxu0 0
      %754 = vmatpush2.bf16.msra.mxu0 0
      %755 = vmatprep.subr.bf16.mxu0 0
      %756 = vmatpush2.bf16.msra.mxu0 0
      %757 = vmatprep.subr.bf16.mxu0 0
      %758 = vmatpush2.bf16.msra.mxu0 0
      %759 = vmatprep.subr.bf16.mxu0 0
      %760 = vmatpush2.bf16.msra.mxu0 0
      %761 = vmatprep.subr.bf16.mxu0 0
      %762 = vmatpush2.bf16.msra.mxu0 0
      %763 = vmatprep.subr.bf16.mxu0 0
      %764 = vmatpush2.bf16.msra.mxu0 0
      %765 = vmatprep.subr.bf16.mxu0 0
      %766 = vmatpush2.bf16.msra.mxu0 0
      %767 = vmatprep.subr.bf16.mxu0 0
      %768 = vmatpush2.bf16.msra.mxu0 0
      %769 = vmatprep.mubr.bf16.mxu0 0
      %770 = vmatmul.mubr.bf16.gmra.mxu0 %v669
      %v771 = vpop.f32.mrf.mxu0
      %v772 = vadd.f32 0.0, %v771
      %v773 = vpop.f32.mrf.mxu0
      %v774 = vpop.f32.mrf.mxu0
      %v775 = vadd.f32 0.0, %v774
      %v776 = vpop.f32.mrf.mxu0
      %777 = vmatprep.mubr.bf16.mxu0 0
      %778 = vmatmul.mubr.bf16.gmra.mxu0 %v670
      %v779 = vpop.f32.mrf.mxu0
      %v780 = vadd.f32 0.0, %v779
      %v781 = vpop.f32.mrf.mxu0
      %v782 = vpop.f32.mrf.mxu0
      %v783 = vadd.f32 0.0, %v782
      %v784 = vpop.f32.mrf.mxu0
      %785 = vmatprep.mubr.bf16.mxu0 0
      %786 = vmatmul.mubr.bf16.gmra.mxu0 %v671
      %v787 = vpop.f32.mrf.mxu0
      %v788 = vadd.f32 0.0, %v787
      %v789 = vpop.f32.mrf.mxu0
      %v790 = vpop.f32.mrf.mxu0
      %v791 = vadd.f32 0.0, %v790
      %v792 = vpop.f32.mrf.mxu0
      %793 = vmatprep.mubr.bf16.mxu0 0
      %794 = vmatmul.mubr.bf16.gmra.mxu0 %v672
      %v795 = vpop.f32.mrf.mxu0
      %v796 = vadd.f32 0.0, %v795
      %v797 = vpop.f32.mrf.mxu0
      %v798 = vpop.f32.mrf.mxu0
      %v799 = vadd.f32 0.0, %v798
      %v800 = vpop.f32.mrf.mxu0
      %801 = vdwg.mxu0
      %v802 = vpack.c.bf16 %v775, %v772
      %v803 = vpack.c.bf16 %v783, %v780
      %v804 = vpack.c.bf16 %v791, %v788
      %v805 = vpack.c.bf16 %v799, %v796
      %v806 = vld [vmem:[%s5] sm:$0x1]
      %v808 = vlaneseq
      %v809 = vshrl.u32 %v808, 7
      %v810 = vsub.s32 0, %v809
      %v811 = vrot.slane %v806, %v810
      %813 = vmatprep.subr.bf16.mxu0 0
      %814 = vmatpush1.bf16.msra.mxu0 0
      %815 = vmatprep.subr.bf16.mxu0 0
      %816 = vmatpush1.bf16.msra.mxu0 0
      %817 = vmatprep.subr.bf16.mxu0 0
      %818 = vmatpush1.bf16.msra.mxu0 0
      %819 = vmatprep.subr.bf16.mxu0 0
      %820 = vmatpush1.bf16.msra.mxu0 0
      %821 = vmatprep.subr.bf16.mxu0 0
      %822 = vmatpush1.bf16.msra.mxu0 %v805
      %823 = vmatprep.subr.bf16.mxu0 0
      %824 = vmatpush1.bf16.msra.mxu0 %v804
      %825 = vmatprep.subr.bf16.mxu0 0
      %826 = vmatpush1.bf16.msra.mxu0 %v803
      %827 = vmatprep.subr.bf16.mxu0 0
      %828 = vmatpush1.bf16.msra.mxu0 %v802
      %829 = vmatprep.subr.bf16.mxu0 0
      %830 = vmatpush2.bf16.msra.mxu0 0
      %831 = vmatprep.subr.bf16.mxu0 0
      %832 = vmatpush2.bf16.msra.mxu0 0
      %833 = vmatprep.subr.bf16.mxu0 0
      %834 = vmatpush2.bf16.msra.mxu0 0
      %835 = vmatprep.subr.bf16.mxu0 0
      %836 = vmatpush2.bf16.msra.mxu0 0
      %837 = vmatprep.subr.bf16.mxu0 0
      %838 = vmatpush2.bf16.msra.mxu0 0
      %839 = vmatprep.subr.bf16.mxu0 0
      %840 = vmatpush2.bf16.msra.mxu0 0
      %841 = vmatprep.subr.bf16.mxu0 0
      %842 = vmatpush2.bf16.msra.mxu0 0
      %843 = vmatprep.subr.bf16.mxu0 0
      %844 = vmatpush2.bf16.msra.mxu0 0
      %845 = vmatprep.mubr.bf16.mxu0 0
      %846 = vmatmul.mubr.bf16.gmra.mxu0 %v445
      %v847 = vpop.f32.mrf.mxu0
      %v848 = vadd.f32 %v811, %v847
      %v849 = vpop.f32.mrf.mxu0
      %v850 = vpop.f32.mrf.mxu0
      %v851 = vadd.f32 %v811, %v850
      %v852 = vpop.f32.mrf.mxu0
      %853 = vmatprep.mubr.bf16.mxu0 0
      %854 = vmatmul.mubr.bf16.gmra.mxu0 %v448
      %v855 = vpop.f32.mrf.mxu0
      %v856 = vadd.f32 %v811, %v855
      %v857 = vpop.f32.mrf.mxu0
      %v858 = vpop.f32.mrf.mxu0
      %v859 = vadd.f32 %v811, %v858
      %v860 = vpop.f32.mrf.mxu0
      %861 = vmatprep.mubr.bf16.mxu0 0
      %862 = vmatmul.mubr.bf16.gmra.mxu0 %v451
      %v863 = vpop.f32.mrf.mxu0
      %v864 = vadd.f32 %v811, %v863
      %v865 = vpop.f32.mrf.mxu0
      %v866 = vpop.f32.mrf.mxu0
      %v867 = vadd.f32 %v811, %v866
      %v868 = vpop.f32.mrf.mxu0
      %869 = vmatprep.mubr.bf16.mxu0 0
      %870 = vmatmul.mubr.bf16.gmra.mxu0 %v454
      %v871 = vpop.f32.mrf.mxu0
      %v872 = vadd.f32 %v811, %v871
      %v873 = vpop.f32.mrf.mxu0
      %v874 = vpop.f32.mrf.mxu0
      %v875 = vadd.f32 %v811, %v874
      %v876 = vpop.f32.mrf.mxu0
      %877 = vdwg.mxu0
      %v878 = vmax.f32 %v848, 0.0
      %v879 = vmax.f32 %v851, 0.0
      %v880 = vmax.f32 %v856, 0.0
      %v881 = vmax.f32 %v859, 0.0
      %v882 = vmax.f32 %v864, 0.0
      %v883 = vmax.f32 %v867, 0.0
      %v884 = vmax.f32 %v872, 0.0
      %v885 = vmax.f32 %v875, 0.0
      %v886 = vrot.slane %v878, 4
      %v887 = vadd.f32 %v878, %v886
      %v888 = vrot.slane %v887, 2
      %v889 = vadd.f32 %v887, %v888
      %v890 = vrot.slane %v889, 1
      %v891 = vadd.f32 %v889, %v890
      %v892 = vrot.slane %v879, 4
      %v893 = vadd.f32 %v879, %v892
      %v894 = vrot.slane %v893, 2
      %v895 = vadd.f32 %v893, %v894
      %v896 = vrot.slane %v895, 1
      %v897 = vadd.f32 %v895, %v896
      %v898 = vrot.slane %v880, 4
      %v899 = vadd.f32 %v880, %v898
      %v900 = vrot.slane %v899, 2
      %v901 = vadd.f32 %v899, %v900
      %v902 = vrot.slane %v901, 1
      %v903 = vadd.f32 %v901, %v902
      %v904 = vrot.slane %v881, 4
      %v905 = vadd.f32 %v881, %v904
      %v906 = vrot.slane %v905, 2
      %v907 = vadd.f32 %v905, %v906
      %v908 = vrot.slane %v907, 1
      %v909 = vadd.f32 %v907, %v908
      %v910 = vrot.slane %v882, 4
      %v911 = vadd.f32 %v882, %v910
      %v912 = vrot.slane %v911, 2
      %v913 = vadd.f32 %v911, %v912
      %v914 = vrot.slane %v913, 1
      %v915 = vadd.f32 %v913, %v914
      %v916 = vrot.slane %v883, 4
      %v917 = vadd.f32 %v883, %v916
      %v918 = vrot.slane %v917, 2
      %v919 = vadd.f32 %v917, %v918
      %v920 = vrot.slane %v919, 1
      %v921 = vadd.f32 %v919, %v920
      %v922 = vrot.slane %v884, 4
      %v923 = vadd.f32 %v884, %v922
      %v924 = vrot.slane %v923, 2
      %v925 = vadd.f32 %v923, %v924
      %v926 = vrot.slane %v925, 1
      %v927 = vadd.f32 %v925, %v926
      %v928 = vrot.slane %v885, 4
      %v929 = vadd.f32 %v885, %v928
      %v930 = vrot.slane %v929, 2
      %v931 = vadd.f32 %v929, %v930
      %v932 = vrot.slane %v931, 1
      %v933 = vadd.f32 %v931, %v932
      %v934 = vmul.f32 %v891, 0.125
      %v935 = vmul.f32 %v897, 0.125
      %v936 = vmul.f32 %v903, 0.125
      %v937 = vmul.f32 %v909, 0.125
      %v938 = vmul.f32 %v915, 0.125
      %v939 = vmul.f32 %v921, 0.125
      %v940 = vmul.f32 %v927, 0.125
      %v941 = vmul.f32 %v933, 0.125
      %v942 = vpack.c.bf16 %v934, %v934
      %v943 = vpack.c.bf16 %v935, %v935
      %v944 = vpack.c.bf16 %v936, %v936
      %v945 = vpack.c.bf16 %v937, %v937
      %v946 = vpack.c.bf16 %v938, %v938
      %v947 = vpack.c.bf16 %v939, %v939
      %v948 = vpack.c.bf16 %v940, %v940
      %v949 = vpack.c.bf16 %v941, %v941
      %v950 = vld [vmem:[%s6] sm:$0xf]
      %v951 = vld [vmem:[%s6 + $0x4] sm:$0xf]
      %v952 = vld [vmem:[%s6 + $0x8] sm:$0xf]
      %v953 = vld [vmem:[%s6 + $0xc] sm:$0xf]
      %v954 = vld [vmem:[%s6 + $0x10] sm:$0xf]
      %v955 = vld [vmem:[%s6 + $0x14] sm:$0xf]
      %v956 = vld [vmem:[%s6 + $0x18] sm:$0xf]
      %v957 = vld [vmem:[%s6 + $0x1c] sm:$0xf]
      %v958 = vld [vmem:[%s6 + $0x20] sm:$0xf]
      %v959 = vld [vmem:[%s6 + $0x24] sm:$0xf]
      %v960 = vld [vmem:[%s6 + $0x28] sm:$0xf]
      %v961 = vld [vmem:[%s6 + $0x2c] sm:$0xf]
      %v962 = vld [vmem:[%s6 + $0x30] sm:$0xf]
      %v963 = vld [vmem:[%s6 + $0x34] sm:$0xf]
      %v964 = vld [vmem:[%s6 + $0x38] sm:$0xf]
      %v965 = vld [vmem:[%s6 + $0x3c] sm:$0xf]
      %v966 = vld [vmem:[%s7] sm:$0x1]
      %v968 = vlaneseq
      %v969 = vshrl.u32 %v968, 7
      %v970 = vsub.s32 0, %v969
      %v971 = vrot.slane %v966, %v970
      %v981 = vunpack.c.l.b16 %v942
      %v982 = vunpack.c.l.b16 %v943
      %v983 = vunpack.c.l.b16 %v944
      %v984 = vunpack.c.l.b16 %v945
      %v985 = vunpack.c.l.b16 %v946
      %v986 = vunpack.c.l.b16 %v947
      %v987 = vunpack.c.l.b16 %v948
      %v988 = vunpack.c.l.b16 %v949
      %vm989 = vcmask 1041409
      %v990 = vsel %vm989, %v982, %v981
      %vm991 = vcmask 1042434
      %v992 = vsel %vm991, %v983, %v990
      %vm993 = vcmask 1043459
      %v994 = vsel %vm993, %v984, %v992
      %vm995 = vcmask 1044484
      %v996 = vsel %vm995, %v985, %v994
      %vm997 = vcmask 1045509
      %v998 = vsel %vm997, %v986, %v996
      %vm999 = vcmask 1046534
      %v1000 = vsel %vm999, %v987, %v998
      %vm1001 = vcmask 1047559
      %v1002 = vsel %vm1001, %v988, %v1000
      %v1003 = vpack.c.b16 %v1002, %v1002
      %v1021 = vunpack.c.l.b16 %v950
      %v1022 = vunpack.c.l.b16 %v951
      %v1023 = vunpack.c.l.b16 %v952
      %v1024 = vunpack.c.l.b16 %v953
      %v1025 = vunpack.c.l.b16 %v954
      %v1026 = vunpack.c.l.b16 %v955
      %v1027 = vunpack.c.l.b16 %v956
      %v1028 = vunpack.c.l.b16 %v957
      %v1029 = vunpack.c.l.b16 %v958
      %v1030 = vunpack.c.l.b16 %v959
      %v1031 = vunpack.c.l.b16 %v960
      %v1032 = vunpack.c.l.b16 %v961
      %v1033 = vunpack.c.l.b16 %v962
      %v1034 = vunpack.c.l.b16 %v963
      %v1035 = vunpack.c.l.b16 %v964
      %v1036 = vunpack.c.l.b16 %v965
      %v1037 = vpack.c.b16 %v1022, %v1021
      %v1038 = vpack.c.b16 %v1024, %v1023
      %v1039 = vpack.c.b16 %v1026, %v1025
      %v1040 = vpack.c.b16 %v1028, %v1027
      %v1041 = vpack.c.b16 %v1030, %v1029
      %v1042 = vpack.c.b16 %v1032, %v1031
      %v1043 = vpack.c.b16 %v1034, %v1033
      %v1044 = vpack.c.b16 %v1036, %v1035
      %1053 = vmatprep.subr.bf16.mxu0 0
      %1054 = vmatpush1.bf16.msra.mxu0 %v1044
      %1055 = vmatprep.subr.bf16.mxu0 0
      %1056 = vmatpush1.bf16.msra.mxu0 %v1043
      %1057 = vmatprep.subr.bf16.mxu0 0
      %1058 = vmatpush1.bf16.msra.mxu0 %v1042
      %1059 = vmatprep.subr.bf16.mxu0 0
      %1060 = vmatpush1.bf16.msra.mxu0 %v1041
      %1061 = vmatprep.subr.bf16.mxu0 0
      %1062 = vmatpush1.bf16.msra.mxu0 %v1040
      %1063 = vmatprep.subr.bf16.mxu0 0
      %1064 = vmatpush1.bf16.msra.mxu0 %v1039
      %1065 = vmatprep.subr.bf16.mxu0 0
      %1066 = vmatpush1.bf16.msra.mxu0 %v1038
      %1067 = vmatprep.subr.bf16.mxu0 0
      %1068 = vmatpush1.bf16.msra.mxu0 %v1037
      %1069 = vmatprep.subr.bf16.mxu0 0
      %1070 = vmatpush2.bf16.msra.mxu0 0
      %1071 = vmatprep.subr.bf16.mxu0 0
      %1072 = vmatpush2.bf16.msra.mxu0 0
      %1073 = vmatprep.subr.bf16.mxu0 0
      %1074 = vmatpush2.bf16.msra.mxu0 0
      %1075 = vmatprep.subr.bf16.mxu0 0
      %1076 = vmatpush2.bf16.msra.mxu0 0
      %1077 = vmatprep.subr.bf16.mxu0 0
      %1078 = vmatpush2.bf16.msra.mxu0 0
      %1079 = vmatprep.subr.bf16.mxu0 0
      %1080 = vmatpush2.bf16.msra.mxu0 0
      %1081 = vmatprep.subr.bf16.mxu0 0
      %1082 = vmatpush2.bf16.msra.mxu0 0
      %1083 = vmatprep.subr.bf16.mxu0 0
      %1084 = vmatpush2.bf16.msra.mxu0 0
      %1085 = vmatprep.mubr.bf16.mxu0 0
      %1086 = vmatmul.mubr.bf16.gmra.mxu0 %v1003
      %v1087 = vpop.f32.mrf.mxu0
      %v1088 = vadd.f32 %v971, %v1087
      %v1089 = vpop.f32.mrf.mxu0
      %v1090 = vpop.f32.mrf.mxu0
      %v1091 = vpop.f32.mrf.mxu0
      %1092 = vdwg.mxu0
      %v1093 = vmax.f32 %v1088, 0.0
      %v1094 = vpack.c.bf16 %v1093, %v1093
      %v1095 = vld [vmem:[%s8] sm:$0xf]
      %v1096 = vld [vmem:[%s8 + $0x4] sm:$0xf]
      %v1097 = vld [vmem:[%s8 + $0x8] sm:$0xf]
      %v1098 = vld [vmem:[%s8 + $0xc] sm:$0xf]
      %v1099 = vld [vmem:[%s8 + $0x10] sm:$0xf]
      %v1100 = vld [vmem:[%s8 + $0x14] sm:$0xf]
      %v1101 = vld [vmem:[%s8 + $0x18] sm:$0xf]
      %v1102 = vld [vmem:[%s8 + $0x1c] sm:$0xf]
      %v1103 = vld [vmem:[%s8 + $0x20] sm:$0xf]
      %v1104 = vld [vmem:[%s8 + $0x24] sm:$0xf]
      %v1105 = vld [vmem:[%s8 + $0x28] sm:$0xf]
      %v1106 = vld [vmem:[%s8 + $0x2c] sm:$0xf]
      %v1107 = vld [vmem:[%s8 + $0x30] sm:$0xf]
      %v1108 = vld [vmem:[%s8 + $0x34] sm:$0xf]
      %v1109 = vld [vmem:[%s8 + $0x38] sm:$0xf]
      %v1110 = vld [vmem:[%s8 + $0x3c] sm:$0xf]
      %v1111 = vld [vmem:[%s9] sm:$0x1]
      %v1113 = vlaneseq
      %v1114 = vshrl.u32 %v1113, 7
      %v1115 = vsub.s32 0, %v1114
      %v1116 = vrot.slane %v1111, %v1115
      %v1134 = vunpack.c.l.b16 %v1095
      %v1135 = vunpack.c.l.b16 %v1096
      %v1136 = vunpack.c.l.b16 %v1097
      %v1137 = vunpack.c.l.b16 %v1098
      %v1138 = vunpack.c.l.b16 %v1099
      %v1139 = vunpack.c.l.b16 %v1100
      %v1140 = vunpack.c.l.b16 %v1101
      %v1141 = vunpack.c.l.b16 %v1102
      %v1142 = vunpack.c.l.b16 %v1103
      %v1143 = vunpack.c.l.b16 %v1104
      %v1144 = vunpack.c.l.b16 %v1105
      %v1145 = vunpack.c.l.b16 %v1106
      %v1146 = vunpack.c.l.b16 %v1107
      %v1147 = vunpack.c.l.b16 %v1108
      %v1148 = vunpack.c.l.b16 %v1109
      %v1149 = vunpack.c.l.b16 %v1110
      %v1150 = vpack.c.b16 %v1135, %v1134
      %v1151 = vpack.c.b16 %v1137, %v1136
      %v1152 = vpack.c.b16 %v1139, %v1138
      %v1153 = vpack.c.b16 %v1141, %v1140
      %v1154 = vpack.c.b16 %v1143, %v1142
      %v1155 = vpack.c.b16 %v1145, %v1144
      %v1156 = vpack.c.b16 %v1147, %v1146
      %v1157 = vpack.c.b16 %v1149, %v1148
      %1166 = vmatprep.subr.bf16.mxu0 0
      %1167 = vmatpush1.bf16.msra.mxu0 %v1157
      %1168 = vmatprep.subr.bf16.mxu0 0
      %1169 = vmatpush1.bf16.msra.mxu0 %v1156
      %1170 = vmatprep.subr.bf16.mxu0 0
      %1171 = vmatpush1.bf16.msra.mxu0 %v1155
      %1172 = vmatprep.subr.bf16.mxu0 0
      %1173 = vmatpush1.bf16.msra.mxu0 %v1154
      %1174 = vmatprep.subr.bf16.mxu0 0
      %1175 = vmatpush1.bf16.msra.mxu0 %v1153
      %1176 = vmatprep.subr.bf16.mxu0 0
      %1177 = vmatpush1.bf16.msra.mxu0 %v1152
      %1178 = vmatprep.subr.bf16.mxu0 0
      %1179 = vmatpush1.bf16.msra.mxu0 %v1151
      %1180 = vmatprep.subr.bf16.mxu0 0
      %1181 = vmatpush1.bf16.msra.mxu0 %v1150
      %1182 = vmatprep.subr.bf16.mxu0 0
      %1183 = vmatpush2.bf16.msra.mxu0 0
      %1184 = vmatprep.subr.bf16.mxu0 0
      %1185 = vmatpush2.bf16.msra.mxu0 0
      %1186 = vmatprep.subr.bf16.mxu0 0
      %1187 = vmatpush2.bf16.msra.mxu0 0
      %1188 = vmatprep.subr.bf16.mxu0 0
      %1189 = vmatpush2.bf16.msra.mxu0 0
      %1190 = vmatprep.subr.bf16.mxu0 0
      %1191 = vmatpush2.bf16.msra.mxu0 0
      %1192 = vmatprep.subr.bf16.mxu0 0
      %1193 = vmatpush2.bf16.msra.mxu0 0
      %1194 = vmatprep.subr.bf16.mxu0 0
      %1195 = vmatpush2.bf16.msra.mxu0 0
      %1196 = vmatprep.subr.bf16.mxu0 0
      %1197 = vmatpush2.bf16.msra.mxu0 0
      %1198 = vmatprep.mubr.bf16.mxu0 0
      %1199 = vmatmul.mubr.bf16.gmra.mxu0 %v1094
      %v1200 = vpop.f32.mrf.mxu0
      %v1201 = vadd.f32 %v1116, %v1200
      %v1202 = vpop.f32.mrf.mxu0
      %v1203 = vpop.f32.mrf.mxu0
      %v1204 = vpop.f32.mrf.mxu0
      %1205 = vdwg.mxu0
      %1206 = vst [vmem:[%s381] sm:$0xff] %v1201
      %p1207 = scmp.lt.s32.totalorder %s21, 1
      %s1208 = scalar_select %p1207, %s21, 1
      %s1209 = smul.addr %s1208, 8
      %s1210 = scalar_lea.vmem %s10, %s1209
      // Predicated region
      $region61: #{gcn_reg_1mlp_forward.1} parent=59 // pred_check
        %p1211 = pneg %p259
      $region62: #{gcn_reg_1mlp_forward.1} parent=59 // pred_check_branch
        %1213 = sbr.rel (%p1211) target = $region64
      $region63: #{gcn_reg_1mlp_forward.1} parent=59 // pred_region
        _
      $region64: #{gcn_reg_1mlp_forward.1} parent=59 // pred_fallthru
        _
    $region60: #{gcn_reg_1mlp_forward.1} parent=5 // pred_fallthru
      _
    %p1214 = scmp.le.s32.totalorder 2, %s16
    // Predicated region
    $region65: #{gcn_reg_1mlp_forward.1} parent=5 // pred_check
      %p1215 = pneg %p1214
    $region66: #{gcn_reg_1mlp_forward.1} parent=5 // pred_check_branch
      %1217 = sbr.rel (%p1215) target = $region68
    $region67: #{gcn_reg_1mlp_forward.1} parent=5 // pred_region
      %s1218 = ssub.s32 %s16, 2
      // Predicated region
      $region69: #{gcn_reg_1mlp_forward.1} parent=67 // pred_check
        %p1219 = pneg %p265
      $region70: #{gcn_reg_1mlp_forward.1} parent=67 // pred_check_branch
        %1221 = sbr.rel (%p1219) target = $region72
      $region71: #{gcn_reg_1mlp_forward.1} parent=67 // pred_region
        %p1222 = scmp.lt.s32.totalorder %s22, 1
        %s1223 = scalar_select %p1222, %s22, 1
        %s1224 = smul.addr %s1223, 8
        %s1225 = scalar_lea.vmem %s10, %s1224
      $region72: #{gcn_reg_1mlp_forward.1} parent=67 // pred_fallthru
        _
    $region68: #{gcn_reg_1mlp_forward.1} parent=5 // pred_fallthru
      _
  $region6: #{gcn_reg_1mlp_forward.1} parent=0 // loop_footer
    %s20 = sadd.s32 1, %s16
  $region7: #{gcn_reg_1mlp_forward.1} parent=0 // loop_footer_branch
    %15 = sbr.rel target = $region3
  $region8: #{gcn_reg_1mlp_forward.1} parent=0 // loop_exit
    _

</llo_original>
